<compile_context>
chip_gen: v5e
topology: v5e:2x2
jax: 0.10.0
libtpu: 0.0.40
codegen_flags: <defaults>
</compile_context>

<pallas_src>
import jax
import jax.numpy as jnp
from jax.experimental import pallas as pl
from jax.experimental.pallas import tpu as pltpu


LANE = 128          # TPU lane width: pad hidden / action axes to this
SUBLANE = 16        # batch-tile granularity (bf16-friendly sublane packing)
NEG_MASK = -1e30    # bias for padded action columns -> softmax prob exactly 0
MAX_B_TILE = 2048   # cap per-tile rows (keeps VMEM/vreg pressure trivial)


def _round_up(n: int, m: int) -> int:
    return (n + m - 1) // m * m


# ---------------------------------------------------------------------------
# Pallas kernel: fused 3-layer MLP + softmax over one batch tile.
#   obs_ref : (Bt, F)   bf16  (cast done in the wrapper)
#   w*_ref  : bf16 (in, out), zero-padded to lane-aligned widths
#   b*_ref  : (1, out)  f32   (b3 padded with -1e30 on fake action columns)
#   out_ref : (Bt, Ap)  bf16  lane-dense action-probability block
# ---------------------------------------------------------------------------
def policy_mlp_kernel(obs_ref, w1_ref, b1_ref, w2_ref, b2_ref, w3_ref, b3_ref,
                      out_ref):
    # Linear(F -> Hp) + ReLU : bf16 MXU inputs, f32 accumulate, f32 VPU math.
    h1 = jnp.dot(obs_ref[...], w1_ref[...],
                 preferred_element_type=jnp.float32)
    h1 = jnp.maximum(h1 + b1_ref[...], 0.0)                        # (Bt, Hp) f32

    # Linear(Hp -> Hp) + ReLU
    h2 = jnp.dot(h1.astype(jnp.bfloat16), w2_ref[...],
                 preferred_element_type=jnp.float32)
    h2 = jnp.maximum(h2 + b2_ref[...], 0.0)                        # (Bt, Hp) f32

    # Linear(Hp -> Ap); padded columns get -1e30 bias -> prob 0 after softmax.
    logits = jnp.dot(h2.astype(jnp.bfloat16), w3_ref[...],
                     preferred_element_type=jnp.float32)
    logits = logits + b3_ref[...]                                  # (Bt, Ap)

    # Numerically-stable softmax over the (padded) action axis, exact divide.
    m = jnp.max(logits, axis=-1, keepdims=True)
    e = jnp.exp(logits - m)
    s = jnp.sum(e, axis=-1, keepdims=True)
    out_ref[...] = (e / s).astype(out_ref.dtype)                   # bf16 store


# ---------------------------------------------------------------------------
# JAX wrappers.
# ---------------------------------------------------------------------------
def _auto_b_tile(batch: int, num_splits: int) -> int:
    """Few, large batch tiles: `num_splits` grid steps (2 keeps both v7x TCs
    busy; the extra step is negligible on single-TC v5e/v6e)."""
    per = _round_up(max(1, -(-batch // max(1, num_splits))), SUBLANE)
    return min(per, MAX_B_TILE)


def policy_forward(obs_batch, padded_params, n_actions, *,
                   b_tile=None, num_splits=2):
    """Batched policy forward: (B, F) observations -> (B, n_actions) f32 probs."""
    w1, b1, w2, b2, w3, b3 = padded_params
    # Cast the observation slab to bf16 once in the wrapper: halves the only
    # input DMA that scales with B and feeds the MXU its native lhs dtype.
    obs_batch = obs_batch.astype(jnp.bfloat16)
    B, F = obs_batch.shape
    Hp = w1.shape[1]
    Ap = w3.shape[1]

    if b_tile is None:
        b_tile = _auto_b_tile(B, num_splits)
    b_tile = min(_round_up(b_tile, SUBLANE), MAX_B_TILE)
    Bp = _round_up(B, b_tile)
    if Bp != B:
        obs_batch = jnp.pad(obs_batch, ((0, Bp - B), (0, 0)))
    grid = (Bp // b_tile,)

    obs_spec = pl.BlockSpec((b_tile, F), lambda i: (i, 0))
    out_spec = pl.BlockSpec((b_tile, Ap), lambda i: (i, 0))
    # Constant index maps: weights/biases DMA'd once, resident across tiles.
    in_specs = [
        obs_spec,
        pl.BlockSpec((F, Hp), lambda i: (0, 0)),
        pl.BlockSpec((1, Hp), lambda i: (0, 0)),
        pl.BlockSpec((Hp, Hp), lambda i: (0, 0)),
        pl.BlockSpec((1, Hp), lambda i: (0, 0)),
        pl.BlockSpec((Hp, Ap), lambda i: (0, 0)),
        pl.BlockSpec((1, Ap), lambda i: (0, 0)),
    ]

    probs_padded = pl.pallas_call(
        policy_mlp_kernel,
        out_shape=jax.ShapeDtypeStruct((Bp, Ap), jnp.bfloat16),
        grid=grid,
        in_specs=in_specs,
        out_specs=out_spec,
        compiler_params=pltpu.CompilerParams(
            dimension_semantics=("parallel",)),   # both TCs on v7x take tiles
    )(obs_batch, w1, b1, w2, b2, w3, b3)

    # Slice + upcast only the tiny real (B, A) block for downstream consumers
    # (Categorical sampling / log-probs expect f32 probabilities).
    return probs_padded[:B, :n_actions].astype(jnp.float32)


def forward_policy(observation, padded_params, n_actions):
    """Mirror of PolicyLearningAgent.forward: single (F,) obs -> (1, A) probs.

    The batch axis is padded to one 16-row tile; prefer policy_forward() with
    a real rollout batch — at B=1 the kernel is pure dispatch overhead.
    """
    obs = observation.astype(jnp.float32).reshape(1, -1)   # .float().unsqueeze(0)
    return policy_forward(obs, padded_params, n_actions)


# ---------------------------------------------------------------------------
# Parameters: PyTorch Linear-style uniform init + lane-padded bf16 packing.
# ---------------------------------------------------------------------------
def init_params(key, n_features, n_hidden, n_actions):
    def linear(key, fan_in, fan_out):
        k_w, k_b = jax.random.split(key)
        bound = 1.0 / jnp.sqrt(fan_in)
        # stored (in, out): equivalent to torch's (out, in) weight, transposed
        w = jax.random.uniform(k_w, (fan_in, fan_out), jnp.float32,
                               -bound, bound)
        b = jax.random.uniform(k_b, (fan_out,), jnp.float32, -bound, bound)
        return w, b

    k1, k2, k3 = jax.random.split(key, 3)
    w1, b1 = linear(k1, n_features, n_hidden)
    w2, b2 = linear(k2, n_hidden, n_hidden)
    w3, b3 = linear(k3, n_hidden, n_actions)
    return (w1, b1, w2, b2, w3, b3)


def prepare_params(params, *, lane=LANE):
    """Zero-pad hidden/action axes to `lane`, cast weights to bf16.

    b3's padded action columns are set to NEG_MASK so softmax gives them
    probability exactly 0. Returns (padded_params, n_actions).
    """
    w1, b1, w2, b2, w3, b3 = params
    F, H = w1.shape
    A = w3.shape[1]
    Hp = _round_up(H, lane)
    Ap = _round_up(A, lane)

    w1p = jnp.zeros((F, Hp), jnp.bfloat16).at[:, :H].set(w1.astype(jnp.bfloat16))
    b1p = jnp.zeros((1, Hp), jnp.float32).at[:, :H].set(b1.reshape(1, -1))
    w2p = jnp.zeros((Hp, Hp), jnp.bfloat16).at[:H, :H].set(w2.astype(jnp.bfloat16))
    b2p = jnp.zeros((1, Hp), jnp.float32).at[:, :H].set(b2.reshape(1, -1))
    w3p = jnp.zeros((Hp, Ap), jnp.bfloat16).at[:H, :A].set(w3.astype(jnp.bfloat16))
    b3p = jnp.full((1, Ap), NEG_MASK, jnp.float32).at[:, :A].set(b3.reshape(1, -1))
    return (w1p, b1p, w2p, b2p, w3p, b3p), A


def reference_forward(obs_batch, padded_params, n_actions):
    """Pure-jnp reference replicating the kernel's bf16/f32 mixed math
    (f32 result; the kernel additionally rounds the stored probs to bf16)."""
    w1, b1, w2, b2, w3, b3 = padded_params
    x = obs_batch.astype(jnp.bfloat16)
    h1 = jnp.maximum(jnp.dot(x, w1, preferred_element_type=jnp.float32) + b1, 0.0)
    h2 = jnp.maximum(
        jnp.dot(h1.astype(jnp.bfloat16), w2,
                preferred_element_type=jnp.float32) + b2, 0.0)
    logits = jnp.dot(h2.astype(jnp.bfloat16), w3,
                     preferred_element_type=jnp.float32) + b3
    return jax.nn.softmax(logits, axis=-1)[:, :n_actions]


# TODO(synk): Categorical sampling, log-prob bookkeeping, reward transforms and
# file logging in decide()/loss()/policy_loss() are host-side control flow, not
# part of the tensor forward pass, so they are not lowered to Pallas.

if __name__ == "__main__":
    N_FEATURES = 32   # observation feature count
    N_HIDDEN = 64     # hidden width of the policy MLP
    N_ACTIONS = 16    # size of the action space
    BATCH = 256       # batched rollout decisions

    key = jax.random.PRNGKey(0)
    k_obs, k_params = jax.random.split(key)

    params = init_params(k_params, N_FEATURES, N_HIDDEN, N_ACTIONS)
    padded_params, n_actions = prepare_params(params)

    obs_batch = jax.random.normal(k_obs, (BATCH, N_FEATURES), jnp.float32)

    # Batched path (the kernel's intended hot path): 2 grid steps of 128 rows.
    probs = policy_forward(obs_batch, padded_params, n_actions)
    probs = jax.block_until_ready(probs)

    assert probs.shape == (BATCH, N_ACTIONS)
    assert probs.dtype == jnp.float32
    assert bool(jnp.all(probs >= 0.0))
    sums = jnp.sum(probs, axis=-1)
    assert bool(jnp.all(jnp.abs(sums - 1.0) < 1e-2))   # bf16 output rounding

    ref = reference_forward(obs_batch, padded_params, n_actions)
    assert bool(jnp.allclose(probs, ref, atol=1.5e-2))

    # Single-observation path mirroring PolicyLearningAgent.forward().
    single = forward_policy(obs_batch[0], padded_params, n_actions)
    single = jax.block_until_ready(single)
    assert single.shape == (1, N_ACTIONS)
    assert bool(jnp.allclose(single, probs[0:1], atol=1.5e-2))

    print("KERNEL_OK")
</pallas_src>

<mosaic_0001>
module attributes {stable_mosaic.version = 11 : i64} {
  func.func @policy_mlp_kernel(%arg0: i32, %arg1: memref<128x32xbf16, #tpu.memory_space<vmem>>, %arg2: memref<32x128xbf16, #tpu.memory_space<vmem>>, %arg3: memref<1x128xf32, #tpu.memory_space<vmem>>, %arg4: memref<128x128xbf16, #tpu.memory_space<vmem>>, %arg5: memref<1x128xf32, #tpu.memory_space<vmem>>, %arg6: memref<128x128xbf16, #tpu.memory_space<vmem>>, %arg7: memref<1x128xf32, #tpu.memory_space<vmem>>, %arg8: memref<128x128xbf16, #tpu.memory_space<vmem>>) attributes {dimension_semantics = [#tpu.dimension_semantics<parallel>], iteration_bounds = array<i64: 2>, scalar_prefetch = 0 : i64, scratch_operands = 0 : i64, tpu.core_type = #tpu.core_type<tc>, window_params = [{transform_indices = @transform_0, window_bounds = array<i64: 128, 32>}, {pipeline_mode = #tpu.pipeline_mode<synchronous>, transform_indices = @transform_1, window_bounds = array<i64: 32, 128>}, {pipeline_mode = #tpu.pipeline_mode<synchronous>, transform_indices = @transform_2, window_bounds = array<i64: 1, 128>}, {pipeline_mode = #tpu.pipeline_mode<synchronous>, transform_indices = @transform_3, window_bounds = array<i64: 128, 128>}, {pipeline_mode = #tpu.pipeline_mode<synchronous>, transform_indices = @transform_4, window_bounds = array<i64: 1, 128>}, {pipeline_mode = #tpu.pipeline_mode<synchronous>, transform_indices = @transform_5, window_bounds = array<i64: 128, 128>}, {pipeline_mode = #tpu.pipeline_mode<synchronous>, transform_indices = @transform_6, window_bounds = array<i64: 1, 128>}, {transform_indices = @transform_7, window_bounds = array<i64: 128, 128>}]} {
    %c0 = arith.constant 0 : index
    %c0_0 = arith.constant 0 : index
    %0 = vector.load %arg1[%c0, %c0_0] : memref<128x32xbf16, #tpu.memory_space<vmem>>, vector<128x32xbf16>
    %c0_1 = arith.constant 0 : index
    %c0_2 = arith.constant 0 : index
    %1 = vector.load %arg2[%c0_1, %c0_2] : memref<32x128xbf16, #tpu.memory_space<vmem>>, vector<32x128xbf16>
    %cst = arith.constant dense<0.000000e+00> : vector<128x128xf32>
    %2 = tpu.matmul %0, %1, %cst {dimension_numbers = #tpu.dot_dimension_numbers<[1], [0], [0], [1], [0, 0, 1, 1], [], []>} : vector<128x32xbf16>, vector<32x128xbf16>, vector<128x128xf32> -> vector<128x128xf32>
    %c0_3 = arith.constant 0 : index
    %c0_4 = arith.constant 0 : index
    %3 = vector.load %arg3[%c0_3, %c0_4] : memref<1x128xf32, #tpu.memory_space<vmem>>, vector<1x128xf32>
    %4 = vector.broadcast %3 : vector<1x128xf32> to vector<128x128xf32>
    %5 = arith.addf %2, %4 : vector<128x128xf32>
    %cst_5 = arith.constant 0.000000e+00 : f32
    %6 = vector.broadcast %cst_5 : f32 to vector<128x128xf32>
    %7 = arith.maximumf %5, %6 : vector<128x128xf32>
    %8 = arith.truncf %7 : vector<128x128xf32> to vector<128x128xbf16>
    %c0_6 = arith.constant 0 : index
    %c0_7 = arith.constant 0 : index
    %9 = vector.load %arg4[%c0_6, %c0_7] : memref<128x128xbf16, #tpu.memory_space<vmem>>, vector<128x128xbf16>
    %cst_8 = arith.constant dense<0.000000e+00> : vector<128x128xf32>
    %10 = tpu.matmul %8, %9, %cst_8 {dimension_numbers = #tpu.dot_dimension_numbers<[1], [0], [0], [1], [0, 0, 1, 1], [], []>} : vector<128x128xbf16>, vector<128x128xbf16>, vector<128x128xf32> -> vector<128x128xf32>
    %c0_9 = arith.constant 0 : index
    %c0_10 = arith.constant 0 : index
    %11 = vector.load %arg5[%c0_9, %c0_10] : memref<1x128xf32, #tpu.memory_space<vmem>>, vector<1x128xf32>
    %12 = vector.broadcast %11 : vector<1x128xf32> to vector<128x128xf32>
    %13 = arith.addf %10, %12 : vector<128x128xf32>
    %cst_11 = arith.constant 0.000000e+00 : f32
    %14 = vector.broadcast %cst_11 : f32 to vector<128x128xf32>
    %15 = arith.maximumf %13, %14 : vector<128x128xf32>
    %16 = arith.truncf %15 : vector<128x128xf32> to vector<128x128xbf16>
    %c0_12 = arith.constant 0 : index
    %c0_13 = arith.constant 0 : index
    %17 = vector.load %arg6[%c0_12, %c0_13] : memref<128x128xbf16, #tpu.memory_space<vmem>>, vector<128x128xbf16>
    %cst_14 = arith.constant dense<0.000000e+00> : vector<128x128xf32>
    %18 = tpu.matmul %16, %17, %cst_14 {dimension_numbers = #tpu.dot_dimension_numbers<[1], [0], [0], [1], [0, 0, 1, 1], [], []>} : vector<128x128xbf16>, vector<128x128xbf16>, vector<128x128xf32> -> vector<128x128xf32>
    %c0_15 = arith.constant 0 : index
    %c0_16 = arith.constant 0 : index
    %19 = vector.load %arg7[%c0_15, %c0_16] : memref<1x128xf32, #tpu.memory_space<vmem>>, vector<1x128xf32>
    %20 = vector.broadcast %19 : vector<1x128xf32> to vector<128x128xf32>
    %21 = arith.addf %18, %20 : vector<128x128xf32>
    %cst_17 = arith.constant dense<0xFF800000> : vector<128xf32>
    %22 = vector.multi_reduction <maximumf>, %21, %cst_17 [1] : vector<128x128xf32> to vector<128xf32>
    %23 = vector.shape_cast %22 : vector<128xf32> to vector<128x1xf32>
    %24 = vector.broadcast %23 : vector<128x1xf32> to vector<128x128xf32>
    %25 = arith.subf %21, %24 : vector<128x128xf32>
    %26 = math.exp %25 : vector<128x128xf32>
    %cst_18 = arith.constant dense<0.000000e+00> : vector<128xf32>
    %27 = vector.multi_reduction <add>, %26, %cst_18 [1] : vector<128x128xf32> to vector<128xf32>
    %28 = vector.shape_cast %27 : vector<128xf32> to vector<128x1xf32>
    %29 = vector.broadcast %28 : vector<128x1xf32> to vector<128x128xf32>
    %30 = arith.divf %26, %29 : vector<128x128xf32>
    %31 = arith.truncf %30 : vector<128x128xf32> to vector<128x128xbf16>
    %c0_19 = arith.constant 0 : index
    %c0_20 = arith.constant 0 : index
    %32 = vector.load %arg8[%c0_19, %c0_20] : memref<128x128xbf16, #tpu.memory_space<vmem>>, vector<128x128xbf16>
    tpu.vector_store %arg8[%c0_19, %c0_20], %31 {strides = array<i32>} : memref<128x128xbf16, #tpu.memory_space<vmem>>, vector<128x128xbf16>,
    return
  }
  func.func @transform_0(%arg0: i32) -> (i32, i32) {
    %c0_i32 = arith.constant 0 : i32
    %c0_i32_0 = arith.constant 0 : i32
    return %arg0, %c0_i32 : i32, i32
  }
  func.func @transform_1(%arg0: i32) -> (i32, i32) {
    %c0_i32 = arith.constant 0 : i32
    %c0_i32_0 = arith.constant 0 : i32
    %c0_i32_1 = arith.constant 0 : i32
    return %c0_i32, %c0_i32_0 : i32, i32
  }
  func.func @transform_2(%arg0: i32) -> (i32, i32) {
    %c0_i32 = arith.constant 0 : i32
    %c0_i32_0 = arith.constant 0 : i32
    %c0_i32_1 = arith.constant 0 : i32
    return %c0_i32, %c0_i32_0 : i32, i32
  }
  func.func @transform_3(%arg0: i32) -> (i32, i32) {
    %c0_i32 = arith.constant 0 : i32
    %c0_i32_0 = arith.constant 0 : i32
    %c0_i32_1 = arith.constant 0 : i32
    return %c0_i32, %c0_i32_0 : i32, i32
  }
  func.func @transform_4(%arg0: i32) -> (i32, i32) {
    %c0_i32 = arith.constant 0 : i32
    %c0_i32_0 = arith.constant 0 : i32
    %c0_i32_1 = arith.constant 0 : i32
    return %c0_i32, %c0_i32_0 : i32, i32
  }
  func.func @transform_5(%arg0: i32) -> (i32, i32) {
    %c0_i32 = arith.constant 0 : i32
    %c0_i32_0 = arith.constant 0 : i32
    %c0_i32_1 = arith.constant 0 : i32
    return %c0_i32, %c0_i32_0 : i32, i32
  }
  func.func @transform_6(%arg0: i32) -> (i32, i32) {
    %c0_i32 = arith.constant 0 : i32
    %c0_i32_0 = arith.constant 0 : i32
    %c0_i32_1 = arith.constant 0 : i32
    return %c0_i32, %c0_i32_0 : i32, i32
  }
  func.func @transform_7(%arg0: i32) -> (i32, i32) {
    %c0_i32 = arith.constant 0 : i32
    %c0_i32_0 = arith.constant 0 : i32
    return %arg0, %c0_i32 : i32, i32
  }
}

</mosaic_0001>

<llo_original>
// kernel: tpu_custom_call.1
$region0: #{tpu_custom_call.1}
  #allocation0 [shape = 'u32[]', space=smem, size = 0x4, offset = 0x4, fixed_abs, tag = 'smem constant byte address 0x4 - core index']
  #allocation1 [shape = 'u32[72,128]{1,0:T(1,128)}', space=vmem, size = 0x9000, scoped, tag = 'internal scratch']
  %s0 = inlined_call_operand.vmem [shape: bf16[256,32], index: 0, kind: input, shape index: {}]
  %s1 = inlined_call_operand.vmem [shape: bf16[32,128], index: 1, kind: input, shape index: {}]
  %s2 = inlined_call_operand.vmem [shape: f32[1,128], index: 2, kind: input, shape index: {}]
  %s3 = inlined_call_operand.vmem [shape: bf16[128,128], index: 3, kind: input, shape index: {}]
  %s4 = inlined_call_operand.vmem [shape: f32[1,128], index: 4, kind: input, shape index: {}]
  %s5 = inlined_call_operand.vmem [shape: bf16[128,128], index: 5, kind: input, shape index: {}]
  %s6 = inlined_call_operand.vmem [shape: f32[1,128], index: 6, kind: input, shape index: {}]
  %s7 = inlined_call_operand.hbm [shape: bf16[256,128], index: 7, kind: output, shape index: {}]
  %s8 = sld [smem:[#allocation0]]
  $region61: #{tpu_custom_call.1} parent=0
    _
  %s10 = ssub.s32 1, %s8
  %s11 = scalar_select 0, %s10, %s8
  $region1: #{tpu_custom_call.1} parent=0
    #allocation2 [shape = 'u8[65536]{0}', space=vmem, size = 0x10000, scoped, tag = 'output window, operand 0']
    #allocation3 [shape = 's32[2]{0}', space=sflag, size = 0x8, scoped, tag = 'scoped memory for tpu_custom_call.1']
    %12 = vsyncpa [#allocation3], 0
    %s13 = scalar_lea.sflag [#allocation3], 1
    %14 = vsyncpa %s13, 0
    loop: start=0, step=1, limit=4
    $region2: #{tpu_custom_call.1} parent=1 // loop_pre_header
      _
    $region3: #{tpu_custom_call.1} parent=1 // loop_header
      %s16 = sphi 0, %s20
      %p17 = scmp.ge.s32.totalorder %s16, 4
      %s26 = sphi 0, %s28
      %s29 = sphi 0, %s26
      %s30 = sphi 0, %s29
      %s46 = sphi 0, %s30
      %s50 = sphi 0, %s50
      %s52 = sphi 0, %s50
      %s53 = sphi 0, %s52
      %s67 = sphi 0, %s53
      %s71 = sphi 0, %s71
      %s73 = sphi 0, %s71
      %s74 = sphi 0, %s73
      %s88 = sphi 0, %s74
      %s92 = sphi 0, %s92
      %s94 = sphi 0, %s92
      %s95 = sphi 0, %s94
      %s109 = sphi 0, %s95
      %s113 = sphi 0, %s113
      %s115 = sphi 0, %s113
      %s116 = sphi 0, %s115
      %s130 = sphi 0, %s116
      %s134 = sphi 0, %s134
      %s136 = sphi 0, %s134
      %s137 = sphi 0, %s136
      %s151 = sphi 0, %s137
      %s155 = sphi 0, %s155
      %s157 = sphi 0, %s155
      %s158 = sphi 0, %s157
      %s172 = sphi 0, %s158
      %s178 = sphi 0, %s180
      %s181 = sphi 0, %s178
      %s182 = sphi 0, %s181
      %s198 = sphi 0, %s182
    $region4: #{tpu_custom_call.1} parent=1 // loop_header_branch
      %19 = sbr.rel (%p17) target = $region8
    $region5: #{tpu_custom_call.1} parent=1 // loop_body
      %s21 = ssub.s32 %s16, 1
      %s22 = ssub.s32 %s16, 2
      %s23 = sadd.s32 %s16, 1
      %s24 = ssub.s32 %s16, %s23
      %p25 = scmp.eq.s32.totalorder %s24, 0
      %s27 = sadd.s32 %s26, 1
      %s28 = scalar_select %p25, %s26, %s27
      %p31 = pneg %p25
      %p32 = scmp.eq.s32.totalorder %s16, 1
      %p33 = por %p31, %p32
      %p34 = scmp.ne.s32.totalorder %s26, %s29
      %p35 = scmp.eq.s32.totalorder %s16, 0
      %p36 = por %p34, %p35
      %p37 = scmp.ne.s32.totalorder %s26, %s29
      %p38 = scmp.eq.s32.totalorder %s21, 1
      %p39 = por %p37, %p38
      %p40 = scmp.ne.s32.totalorder %s29, %s30
      %p41 = scmp.eq.s32.totalorder %s21, 0
      %p42 = por %p40, %p41
      %p43 = scmp.ne.s32.totalorder %s29, %s30
      %p44 = scmp.eq.s32.totalorder %s22, 1
      %p45 = por %p43, %p44
      %p47 = scmp.ne.s32.totalorder %s30, %s46
      %p48 = scmp.eq.s32.totalorder %s22, 0
      %p49 = por %p47, %p48
      %s51 = sadd.s32 %s50, 1
      %p54 = scmp.eq.s32.totalorder %s16, 1
      %p55 = scmp.ne.s32.totalorder %s50, %s52
      %p56 = scmp.eq.s32.totalorder %s16, 0
      %p57 = por %p55, %p56
      %p58 = scmp.ne.s32.totalorder %s50, %s52
      %p59 = scmp.eq.s32.totalorder %s21, 1
      %p60 = por %p58, %p59
      %p61 = scmp.ne.s32.totalorder %s52, %s53
      %p62 = scmp.eq.s32.totalorder %s21, 0
      %p63 = por %p61, %p62
      %p64 = scmp.ne.s32.totalorder %s52, %s53
      %p65 = scmp.eq.s32.totalorder %s22, 1
      %p66 = por %p64, %p65
      %p68 = scmp.ne.s32.totalorder %s53, %s67
      %p69 = scmp.eq.s32.totalorder %s22, 0
      %p70 = por %p68, %p69
      %s72 = sadd.s32 %s71, 1
      %p75 = scmp.eq.s32.totalorder %s16, 1
      %p76 = scmp.ne.s32.totalorder %s71, %s73
      %p77 = scmp.eq.s32.totalorder %s16, 0
      %p78 = por %p76, %p77
      %p79 = scmp.ne.s32.totalorder %s71, %s73
      %p80 = scmp.eq.s32.totalorder %s21, 1
      %p81 = por %p79, %p80
      %p82 = scmp.ne.s32.totalorder %s73, %s74
      %p83 = scmp.eq.s32.totalorder %s21, 0
      %p84 = por %p82, %p83
      %p85 = scmp.ne.s32.totalorder %s73, %s74
      %p86 = scmp.eq.s32.totalorder %s22, 1
      %p87 = por %p85, %p86
      %p89 = scmp.ne.s32.totalorder %s74, %s88
      %p90 = scmp.eq.s32.totalorder %s22, 0
      %p91 = por %p89, %p90
      %s93 = sadd.s32 %s92, 1
      %p96 = scmp.eq.s32.totalorder %s16, 1
      %p97 = scmp.ne.s32.totalorder %s92, %s94
      %p98 = scmp.eq.s32.totalorder %s16, 0
      %p99 = por %p97, %p98
      %p100 = scmp.ne.s32.totalorder %s92, %s94
      %p101 = scmp.eq.s32.totalorder %s21, 1
      %p102 = por %p100, %p101
      %p103 = scmp.ne.s32.totalorder %s94, %s95
      %p104 = scmp.eq.s32.totalorder %s21, 0
      %p105 = por %p103, %p104
      %p106 = scmp.ne.s32.totalorder %s94, %s95
      %p107 = scmp.eq.s32.totalorder %s22, 1
      %p108 = por %p106, %p107
      %p110 = scmp.ne.s32.totalorder %s95, %s109
      %p111 = scmp.eq.s32.totalorder %s22, 0
      %p112 = por %p110, %p111
      %s114 = sadd.s32 %s113, 1
      %p117 = scmp.eq.s32.totalorder %s16, 1
      %p118 = scmp.ne.s32.totalorder %s113, %s115
      %p119 = scmp.eq.s32.totalorder %s16, 0
      %p120 = por %p118, %p119
      %p121 = scmp.ne.s32.totalorder %s113, %s115
      %p122 = scmp.eq.s32.totalorder %s21, 1
      %p123 = por %p121, %p122
      %p124 = scmp.ne.s32.totalorder %s115, %s116
      %p125 = scmp.eq.s32.totalorder %s21, 0
      %p126 = por %p124, %p125
      %p127 = scmp.ne.s32.totalorder %s115, %s116
      %p128 = scmp.eq.s32.totalorder %s22, 1
      %p129 = por %p127, %p128
      %p131 = scmp.ne.s32.totalorder %s116, %s130
      %p132 = scmp.eq.s32.totalorder %s22, 0
      %p133 = por %p131, %p132
      %s135 = sadd.s32 %s134, 1
      %p138 = scmp.eq.s32.totalorder %s16, 1
      %p139 = scmp.ne.s32.totalorder %s134, %s136
      %p140 = scmp.eq.s32.totalorder %s16, 0
      %p141 = por %p139, %p140
      %p142 = scmp.ne.s32.totalorder %s134, %s136
      %p143 = scmp.eq.s32.totalorder %s21, 1
      %p144 = por %p142, %p143
      %p145 = scmp.ne.s32.totalorder %s136, %s137
      %p146 = scmp.eq.s32.totalorder %s21, 0
      %p147 = por %p145, %p146
      %p148 = scmp.ne.s32.totalorder %s136, %s137
      %p149 = scmp.eq.s32.totalorder %s22, 1
      %p150 = por %p148, %p149
      %p152 = scmp.ne.s32.totalorder %s137, %s151
      %p153 = scmp.eq.s32.totalorder %s22, 0
      %p154 = por %p152, %p153
      %s156 = sadd.s32 %s155, 1
      %p159 = scmp.eq.s32.totalorder %s16, 1
      %p160 = scmp.ne.s32.totalorder %s155, %s157
      %p161 = scmp.eq.s32.totalorder %s16, 0
      %p162 = por %p160, %p161
      %p163 = scmp.ne.s32.totalorder %s155, %s157
      %p164 = scmp.eq.s32.totalorder %s21, 1
      %p165 = por %p163, %p164
      %p166 = scmp.ne.s32.totalorder %s157, %s158
      %p167 = scmp.eq.s32.totalorder %s21, 0
      %p168 = por %p166, %p167
      %p169 = scmp.ne.s32.totalorder %s157, %s158
      %p170 = scmp.eq.s32.totalorder %s22, 1
      %p171 = por %p169, %p170
      %p173 = scmp.ne.s32.totalorder %s158, %s172
      %p174 = scmp.eq.s32.totalorder %s22, 0
      %p175 = por %p173, %p174
      %s176 = ssub.s32 %s16, %s23
      %p177 = scmp.eq.s32.totalorder %s176, 0
      %s179 = sadd.s32 %s178, 1
      %s180 = scalar_select %p177, %s178, %s179
      %p183 = pneg %p177
      %p184 = scmp.eq.s32.totalorder %s16, 1
      %p185 = por %p183, %p184
      %p186 = scmp.ne.s32.totalorder %s178, %s181
      %p187 = scmp.eq.s32.totalorder %s16, 0
      %p188 = por %p186, %p187
      %p189 = scmp.ne.s32.totalorder %s178, %s181
      %p190 = scmp.eq.s32.totalorder %s21, 1
      %p191 = por %p189, %p190
      %p192 = scmp.ne.s32.totalorder %s181, %s182
      %p193 = scmp.eq.s32.totalorder %s21, 0
      %p194 = por %p192, %p193
      %p195 = scmp.ne.s32.totalorder %s181, %s182
      %p196 = scmp.eq.s32.totalorder %s22, 1
      %p197 = por %p195, %p196
      %p199 = scmp.ne.s32.totalorder %s182, %s198
      %p200 = scmp.eq.s32.totalorder %s22, 0
      %p201 = por %p199, %p200
      %p202 = scmp.le.s32.totalorder 1, %s16
      %p203 = scmp.lt.s32.totalorder %s16, 3
      %p204 = pnand %p202, %p203
      %p205 = pneg %p204
      // Predicated region
      $region9: #{tpu_custom_call.1} parent=5 // pred_check
        _
      $region10: #{tpu_custom_call.1} parent=5 // pred_check_branch
        %207 = sbr.rel (%p204) target = $region12
      $region11: #{tpu_custom_call.1} parent=5 // pred_region
        %s208 = ssub.s32 %s16, 1
        // Predicated region
        $region13: #{tpu_custom_call.1} parent=11 // pred_check
          %p209 = pneg %p63
        $region14: #{tpu_custom_call.1} parent=11 // pred_check_branch
          %211 = sbr.rel (%p209) target = $region16
        $region15: #{tpu_custom_call.1} parent=11 // pred_region
          _
        $region16: #{tpu_custom_call.1} parent=11 // pred_fallthru
          _
        // Predicated region
        $region17: #{tpu_custom_call.1} parent=11 // pred_check
          %p212 = pneg %p84
        $region18: #{tpu_custom_call.1} parent=11 // pred_check_branch
          %214 = sbr.rel (%p212) target = $region20
        $region19: #{tpu_custom_call.1} parent=11 // pred_region
          _
        $region20: #{tpu_custom_call.1} parent=11 // pred_fallthru
          _
        // Predicated region
        $region21: #{tpu_custom_call.1} parent=11 // pred_check
          %p215 = pneg %p105
        $region22: #{tpu_custom_call.1} parent=11 // pred_check_branch
          %217 = sbr.rel (%p215) target = $region24
        $region23: #{tpu_custom_call.1} parent=11 // pred_region
          _
        $region24: #{tpu_custom_call.1} parent=11 // pred_fallthru
          _
        // Predicated region
        $region25: #{tpu_custom_call.1} parent=11 // pred_check
          %p218 = pneg %p126
        $region26: #{tpu_custom_call.1} parent=11 // pred_check_branch
          %220 = sbr.rel (%p218) target = $region28
        $region27: #{tpu_custom_call.1} parent=11 // pred_region
          _
        $region28: #{tpu_custom_call.1} parent=11 // pred_fallthru
          _
        // Predicated region
        $region29: #{tpu_custom_call.1} parent=11 // pred_check
          %p221 = pneg %p147
        $region30: #{tpu_custom_call.1} parent=11 // pred_check_branch
          %223 = sbr.rel (%p221) target = $region32
        $region31: #{tpu_custom_call.1} parent=11 // pred_region
          _
        $region32: #{tpu_custom_call.1} parent=11 // pred_fallthru
          _
        // Predicated region
        $region33: #{tpu_custom_call.1} parent=11 // pred_check
          %p224 = pneg %p168
        $region34: #{tpu_custom_call.1} parent=11 // pred_check_branch
          %226 = sbr.rel (%p224) target = $region36
        $region35: #{tpu_custom_call.1} parent=11 // pred_region
          _
        $region36: #{tpu_custom_call.1} parent=11 // pred_fallthru
          _
      $region12: #{tpu_custom_call.1} parent=5 // pred_fallthru
        _
      %p227 = scmp.lt.s32.totalorder %s16, 2
      // Predicated region
      $region37: #{tpu_custom_call.1} parent=5 // pred_check
        %p228 = pneg %p227
      $region38: #{tpu_custom_call.1} parent=5 // pred_check_branch
        %230 = sbr.rel (%p228) target = $region40
      $region39: #{tpu_custom_call.1} parent=5 // pred_region
        // Predicated region
        $region41: #{tpu_custom_call.1} parent=39 // pred_check
          %p231 = pneg %p36
        $region42: #{tpu_custom_call.1} parent=39 // pred_check_branch
          %233 = sbr.rel (%p231) target = $region44
        $region43: #{tpu_custom_call.1} parent=39 // pred_region
          %s234 = smul.u32 16, %s16
          %p235 = scmp.lt.s32.totalorder %s234, 31
          %s236 = scalar_select %p235, %s234, 31
          %s237 = smul.addr %s236, 4
          %s238 = scalar_lea.vmem %s0, %s237
          %s239 = smul.u32 16, %s16
        $region44: #{tpu_custom_call.1} parent=39 // pred_fallthru
          _
      $region40: #{tpu_custom_call.1} parent=5 // pred_fallthru
        _
      %p240 = scmp.le.s32.totalorder 1, %s16
      %p241 = scmp.lt.s32.totalorder %s16, 3
      %p242 = pnand %p240, %p241
      %p243 = pneg %p242
      // Predicated region
      $region45: #{tpu_custom_call.1} parent=5 // pred_check
        _
      $region46: #{tpu_custom_call.1} parent=5 // pred_check_branch
        %245 = sbr.rel (%p242) target = $region48
      $region47: #{tpu_custom_call.1} parent=5 // pred_region
        %s246 = ssub.s32 %s16, 1
        %s247 = smul.u32 16, %s21
        %p248 = scmp.lt.s32.totalorder %s247, 31
        %s249 = scalar_select %p248, %s247, 31
        %s250 = smul.addr %s249, 4
        %s251 = scalar_lea.vmem %s0, %s250
        %p252 = pneg %p42
        %p253 = pneg %p39
        %p254 = pneg %p63
        %p255 = pneg %p60
        %p256 = pneg %p84
        %p257 = pneg %p81
        %p258 = pneg %p105
        %p259 = pneg %p102
        %p260 = pneg %p126
        %p261 = pneg %p123
        %p262 = pneg %p147
        %p263 = pneg %p144
        %p264 = pneg %p168
        %p265 = pneg %p165
        %p266 = pneg %p194
        %p267 = pneg %p191
        %s268 = sand.u32 %s181, 1
        %s269 = scalar_lea.sflag [#allocation3], %s268
        %s270 = sand.u32 %s181, 1
        %s271 = smul.addr %s270, 64
        %s272 = scalar_lea.vmem [#allocation2], %s271
        %s273 = smul.u32 16, %s21
        %p274 = scmp.lt.s32.totalorder %s273, 31
        %s275 = scalar_select %p274, %s273, 31
        %s276 = smul.addr %s275, 4
        %s277 = scalar_lea.vmem %s0, %s276
        %s278 = smul.u32 16, %s21
        %s279 = smul.u32 16, %s21
        %v281 = vld [vmem:[%s277] sm:$0xf]
        %v282 = vld [vmem:[%s277 + $0x4] sm:$0xf]
        %v283 = vld [vmem:[%s277 + $0x8] sm:$0xf]
        %v284 = vld [vmem:[%s277 + $0xc] sm:$0xf]
        %v285 = vld [vmem:[%s277 + $0x10] sm:$0xf]
        %v286 = vld [vmem:[%s277 + $0x14] sm:$0xf]
        %v287 = vld [vmem:[%s277 + $0x18] sm:$0xf]
        %v288 = vld [vmem:[%s277 + $0x1c] sm:$0xf]
        %v289 = vld [vmem:[%s277 + $0x20] sm:$0xf]
        %v290 = vld [vmem:[%s277 + $0x24] sm:$0xf]
        %v291 = vld [vmem:[%s277 + $0x28] sm:$0xf]
        %v292 = vld [vmem:[%s277 + $0x2c] sm:$0xf]
        %v293 = vld [vmem:[%s277 + $0x30] sm:$0xf]
        %v294 = vld [vmem:[%s277 + $0x34] sm:$0xf]
        %v295 = vld [vmem:[%s277 + $0x38] sm:$0xf]
        %v296 = vld [vmem:[%s277 + $0x3c] sm:$0xf]
        %v297 = vld [vmem:[%s1] sm:$0xf]
        %v298 = vld [vmem:[%s1 + $0x4] sm:$0xf]
        %v299 = vld [vmem:[%s1 + $0x8] sm:$0xf]
        %v300 = vld [vmem:[%s1 + $0xc] sm:$0xf]
        %v301 = vld [vmem:[%s2] sm:$0x1]
        %v303 = vperm.slane %v301, 0
        %v321 = vunpack.c.l.b16 %v281
        %v322 = vunpack.c.l.b16 %v282
        %v323 = vunpack.c.l.b16 %v283
        %v324 = vunpack.c.l.b16 %v284
        %v325 = vunpack.c.l.b16 %v285
        %v326 = vunpack.c.l.b16 %v286
        %v327 = vunpack.c.l.b16 %v287
        %v328 = vunpack.c.l.b16 %v288
        %v329 = vunpack.c.l.b16 %v289
        %v330 = vunpack.c.l.b16 %v290
        %v331 = vunpack.c.l.b16 %v291
        %v332 = vunpack.c.l.b16 %v292
        %v333 = vunpack.c.l.b16 %v293
        %v334 = vunpack.c.l.b16 %v294
        %v335 = vunpack.c.l.b16 %v295
        %v336 = vunpack.c.l.b16 %v296
        %v337 = vpack.c.b16 %v322, %v321
        %v338 = vpack.c.b16 %v324, %v323
        %v339 = vpack.c.b16 %v326, %v325
        %v340 = vpack.c.b16 %v328, %v327
        %v341 = vpack.c.b16 %v330, %v329
        %v342 = vpack.c.b16 %v332, %v331
        %v343 = vpack.c.b16 %v334, %v333
        %v344 = vpack.c.b16 %v336, %v335
        %v349 = vunpack.c.l.b16 %v297
        %v350 = vunpack.c.l.b16 %v298
        %v351 = vunpack.c.l.b16 %v299
        %v352 = vunpack.c.l.b16 %v300
        %v353 = vpack.c.b16 %v350, %v349
        %v354 = vpack.c.b16 %v352, %v351
        %vm357 = vcmask 261120
        %v359 = vsel %vm357, %v337, 0
        %v362 = vsel %vm357, %v338, 0
        %v365 = vsel %vm357, %v339, 0
        %v368 = vsel %vm357, %v340, 0
        %v371 = vsel %vm357, %v341, 0
        %v374 = vsel %vm357, %v342, 0
        %v377 = vsel %vm357, %v343, 0
        %v380 = vsel %vm357, %v344, 0
        %382 = vmatpush.bf16.msra.mxu0 0
        %383 = vmatpush.bf16.msra.mxu0 0
        %384 = vmatpush.bf16.msra.mxu0 0
        %385 = vmatpush.bf16.msra.mxu0 0
        %386 = vmatpush.bf16.msra.mxu0 0
        %387 = vmatpush.bf16.msra.mxu0 0
        %388 = vmatpush.bf16.msra.mxu0 %v354
        %389 = vmatpush.bf16.msra.mxu0 %v353
        %390 = vmatmul.bf16.gmra.mxu0 %v359
        %v391 = vpop.f32.mrf.mxu0
        %v392 = vadd.f32 %v303, %v391
        %v393 = vpop.f32.mrf.mxu0
        %v394 = vadd.f32 %v303, %v393
        %395 = vmatmul.bf16.gmra.mxu0 %v362
        %v396 = vpop.f32.mrf.mxu0
        %v397 = vadd.f32 %v303, %v396
        %v398 = vpop.f32.mrf.mxu0
        %v399 = vadd.f32 %v303, %v398
        %400 = vmatmul.bf16.gmra.mxu0 %v365
        %v401 = vpop.f32.mrf.mxu0
        %v402 = vadd.f32 %v303, %v401
        %v403 = vpop.f32.mrf.mxu0
        %v404 = vadd.f32 %v303, %v403
        %405 = vmatmul.bf16.gmra.mxu0 %v368
        %v406 = vpop.f32.mrf.mxu0
        %v407 = vadd.f32 %v303, %v406
        %v408 = vpop.f32.mrf.mxu0
        %v409 = vadd.f32 %v303, %v408
        %410 = vmatmul.bf16.gmra.mxu0 %v371
        %v411 = vpop.f32.mrf.mxu0
        %v412 = vadd.f32 %v303, %v411
        %v413 = vpop.f32.mrf.mxu0
        %v414 = vadd.f32 %v303, %v413
        %415 = vmatmul.bf16.gmra.mxu0 %v374
        %v416 = vpop.f32.mrf.mxu0
        %v417 = vadd.f32 %v303, %v416
        %v418 = vpop.f32.mrf.mxu0
        %v419 = vadd.f32 %v303, %v418
        %420 = vmatmul.bf16.gmra.mxu0 %v377
        %v421 = vpop.f32.mrf.mxu0
        %v422 = vadd.f32 %v303, %v421
        %v423 = vpop.f32.mrf.mxu0
        %v424 = vadd.f32 %v303, %v423
        %425 = vmatmul.bf16.gmra.mxu0 %v380
        %v426 = vpop.f32.mrf.mxu0
        %v427 = vadd.f32 %v303, %v426
        %v428 = vpop.f32.mrf.mxu0
        %v429 = vadd.f32 %v303, %v428
        %430 = vdwg.mxu0
        %v431 = vmax.f32 %v392, 0.0
        %v432 = vmax.f32 %v394, 0.0
        %v433 = vmax.f32 %v397, 0.0
        %v434 = vmax.f32 %v399, 0.0
        %v435 = vmax.f32 %v402, 0.0
        %v436 = vmax.f32 %v404, 0.0
        %v437 = vmax.f32 %v407, 0.0
        %v438 = vmax.f32 %v409, 0.0
        %v439 = vmax.f32 %v412, 0.0
        %v440 = vmax.f32 %v414, 0.0
        %v441 = vmax.f32 %v417, 0.0
        %v442 = vmax.f32 %v419, 0.0
        %v443 = vmax.f32 %v422, 0.0
        %v444 = vmax.f32 %v424, 0.0
        %v445 = vmax.f32 %v427, 0.0
        %v446 = vmax.f32 %v429, 0.0
        %v447 = vpack.c.bf16 %v432, %v431
        %v448 = vpack.c.bf16 %v434, %v433
        %v449 = vpack.c.bf16 %v436, %v435
        %v450 = vpack.c.bf16 %v438, %v437
        %v451 = vpack.c.bf16 %v440, %v439
        %v452 = vpack.c.bf16 %v442, %v441
        %v453 = vpack.c.bf16 %v444, %v443
        %v454 = vpack.c.bf16 %v446, %v445
        %v455 = vld [vmem:[%s3] sm:$0xf]
        %v456 = vld [vmem:[%s3 + $0x4] sm:$0xf]
        %v457 = vld [vmem:[%s3 + $0x8] sm:$0xf]
        %v458 = vld [vmem:[%s3 + $0xc] sm:$0xf]
        %v459 = vld [vmem:[%s3 + $0x10] sm:$0xf]
        %v460 = vld [vmem:[%s3 + $0x14] sm:$0xf]
        %v461 = vld [vmem:[%s3 + $0x18] sm:$0xf]
        %v462 = vld [vmem:[%s3 + $0x1c] sm:$0xf]
        %v463 = vld [vmem:[%s3 + $0x20] sm:$0xf]
        %v464 = vld [vmem:[%s3 + $0x24] sm:$0xf]
        %v465 = vld [vmem:[%s3 + $0x28] sm:$0xf]
        %v466 = vld [vmem:[%s3 + $0x2c] sm:$0xf]
        %v467 = vld [vmem:[%s3 + $0x30] sm:$0xf]
        %v468 = vld [vmem:[%s3 + $0x34] sm:$0xf]
        %v469 = vld [vmem:[%s3 + $0x38] sm:$0xf]
        %v470 = vld [vmem:[%s3 + $0x3c] sm:$0xf]
        %v471 = vld [vmem:[%s4] sm:$0x1]
        %v473 = vperm.slane %v471, 0
        %v491 = vunpack.c.l.b16 %v455
        %v492 = vunpack.c.l.b16 %v456
        %v493 = vunpack.c.l.b16 %v457
        %v494 = vunpack.c.l.b16 %v458
        %v495 = vunpack.c.l.b16 %v459
        %v496 = vunpack.c.l.b16 %v460
        %v497 = vunpack.c.l.b16 %v461
        %v498 = vunpack.c.l.b16 %v462
        %v499 = vunpack.c.l.b16 %v463
        %v500 = vunpack.c.l.b16 %v464
        %v501 = vunpack.c.l.b16 %v465
        %v502 = vunpack.c.l.b16 %v466
        %v503 = vunpack.c.l.b16 %v467
        %v504 = vunpack.c.l.b16 %v468
        %v505 = vunpack.c.l.b16 %v469
        %v506 = vunpack.c.l.b16 %v470
        %v507 = vpack.c.b16 %v492, %v491
        %v508 = vpack.c.b16 %v494, %v493
        %v509 = vpack.c.b16 %v496, %v495
        %v510 = vpack.c.b16 %v498, %v497
        %v511 = vpack.c.b16 %v500, %v499
        %v512 = vpack.c.b16 %v502, %v501
        %v513 = vpack.c.b16 %v504, %v503
        %v514 = vpack.c.b16 %v506, %v505
        %523 = vmatpush.bf16.msra.mxu0 %v514
        %524 = vmatpush.bf16.msra.mxu0 %v513
        %525 = vmatpush.bf16.msra.mxu0 %v512
        %526 = vmatpush.bf16.msra.mxu0 %v511
        %527 = vmatpush.bf16.msra.mxu0 %v510
        %528 = vmatpush.bf16.msra.mxu0 %v509
        %529 = vmatpush.bf16.msra.mxu0 %v508
        %530 = vmatpush.bf16.msra.mxu0 %v507
        %531 = vmatmul.bf16.gmra.mxu0 %v447
        %v532 = vpop.f32.mrf.mxu0
        %v533 = vadd.f32 %v473, %v532
        %v534 = vpop.f32.mrf.mxu0
        %v535 = vadd.f32 %v473, %v534
        %536 = vmatmul.bf16.gmra.mxu0 %v448
        %v537 = vpop.f32.mrf.mxu0
        %v538 = vadd.f32 %v473, %v537
        %v539 = vpop.f32.mrf.mxu0
        %v540 = vadd.f32 %v473, %v539
        %541 = vmatmul.bf16.gmra.mxu0 %v449
        %v542 = vpop.f32.mrf.mxu0
        %v543 = vadd.f32 %v473, %v542
        %v544 = vpop.f32.mrf.mxu0
        %v545 = vadd.f32 %v473, %v544
        %546 = vmatmul.bf16.gmra.mxu0 %v450
        %v547 = vpop.f32.mrf.mxu0
        %v548 = vadd.f32 %v473, %v547
        %v549 = vpop.f32.mrf.mxu0
        %v550 = vadd.f32 %v473, %v549
        %551 = vmatmul.bf16.gmra.mxu0 %v451
        %v552 = vpop.f32.mrf.mxu0
        %v553 = vadd.f32 %v473, %v552
        %v554 = vpop.f32.mrf.mxu0
        %v555 = vadd.f32 %v473, %v554
        %556 = vmatmul.bf16.gmra.mxu0 %v452
        %v557 = vpop.f32.mrf.mxu0
        %v558 = vadd.f32 %v473, %v557
        %v559 = vpop.f32.mrf.mxu0
        %v560 = vadd.f32 %v473, %v559
        %561 = vmatmul.bf16.gmra.mxu0 %v453
        %v562 = vpop.f32.mrf.mxu0
        %v563 = vadd.f32 %v473, %v562
        %v564 = vpop.f32.mrf.mxu0
        %v565 = vadd.f32 %v473, %v564
        %566 = vmatmul.bf16.gmra.mxu0 %v454
        %v567 = vpop.f32.mrf.mxu0
        %v568 = vadd.f32 %v473, %v567
        %v569 = vpop.f32.mrf.mxu0
        %v570 = vadd.f32 %v473, %v569
        %571 = vdwg.mxu0
        %v572 = vmax.f32 %v533, 0.0
        %v573 = vmax.f32 %v535, 0.0
        %v574 = vmax.f32 %v538, 0.0
        %v575 = vmax.f32 %v540, 0.0
        %v576 = vmax.f32 %v543, 0.0
        %v577 = vmax.f32 %v545, 0.0
        %v578 = vmax.f32 %v548, 0.0
        %v579 = vmax.f32 %v550, 0.0
        %v580 = vmax.f32 %v553, 0.0
        %v581 = vmax.f32 %v555, 0.0
        %v582 = vmax.f32 %v558, 0.0
        %v583 = vmax.f32 %v560, 0.0
        %v584 = vmax.f32 %v563, 0.0
        %v585 = vmax.f32 %v565, 0.0
        %v586 = vmax.f32 %v568, 0.0
        %v587 = vmax.f32 %v570, 0.0
        %v588 = vpack.c.bf16 %v573, %v572
        %v589 = vpack.c.bf16 %v575, %v574
        %v590 = vpack.c.bf16 %v577, %v576
        %v591 = vpack.c.bf16 %v579, %v578
        %v592 = vpack.c.bf16 %v581, %v580
        %v593 = vpack.c.bf16 %v583, %v582
        %v594 = vpack.c.bf16 %v585, %v584
        %v595 = vpack.c.bf16 %v587, %v586
        %v596 = vld [vmem:[%s5] sm:$0xf]
        %v597 = vld [vmem:[%s5 + $0x4] sm:$0xf]
        %v598 = vld [vmem:[%s5 + $0x8] sm:$0xf]
        %v599 = vld [vmem:[%s5 + $0xc] sm:$0xf]
        %v600 = vld [vmem:[%s5 + $0x10] sm:$0xf]
        %v601 = vld [vmem:[%s5 + $0x14] sm:$0xf]
        %v602 = vld [vmem:[%s5 + $0x18] sm:$0xf]
        %v603 = vld [vmem:[%s5 + $0x1c] sm:$0xf]
        %v604 = vld [vmem:[%s5 + $0x20] sm:$0xf]
        %v605 = vld [vmem:[%s5 + $0x24] sm:$0xf]
        %v606 = vld [vmem:[%s5 + $0x28] sm:$0xf]
        %v607 = vld [vmem:[%s5 + $0x2c] sm:$0xf]
        %v608 = vld [vmem:[%s5 + $0x30] sm:$0xf]
        %v609 = vld [vmem:[%s5 + $0x34] sm:$0xf]
        %v610 = vld [vmem:[%s5 + $0x38] sm:$0xf]
        %v611 = vld [vmem:[%s5 + $0x3c] sm:$0xf]
        %v612 = vld [vmem:[%s6] sm:$0x1]
        %v614 = vperm.slane %v612, 0
        %v632 = vunpack.c.l.b16 %v596
        %v633 = vunpack.c.l.b16 %v597
        %v634 = vunpack.c.l.b16 %v598
        %v635 = vunpack.c.l.b16 %v599
        %v636 = vunpack.c.l.b16 %v600
        %v637 = vunpack.c.l.b16 %v601
        %v638 = vunpack.c.l.b16 %v602
        %v639 = vunpack.c.l.b16 %v603
        %v640 = vunpack.c.l.b16 %v604
        %v641 = vunpack.c.l.b16 %v605
        %v642 = vunpack.c.l.b16 %v606
        %v643 = vunpack.c.l.b16 %v607
        %v644 = vunpack.c.l.b16 %v608
        %v645 = vunpack.c.l.b16 %v609
        %v646 = vunpack.c.l.b16 %v610
        %v647 = vunpack.c.l.b16 %v611
        %v648 = vpack.c.b16 %v633, %v632
        %v649 = vpack.c.b16 %v635, %v634
        %v650 = vpack.c.b16 %v637, %v636
        %v651 = vpack.c.b16 %v639, %v638
        %v652 = vpack.c.b16 %v641, %v640
        %v653 = vpack.c.b16 %v643, %v642
        %v654 = vpack.c.b16 %v645, %v644
        %v655 = vpack.c.b16 %v647, %v646
        %664 = vmatpush.bf16.msra.mxu0 %v655
        %665 = vmatpush.bf16.msra.mxu0 %v654
        %666 = vmatpush.bf16.msra.mxu0 %v653
        %667 = vmatpush.bf16.msra.mxu0 %v652
        %668 = vmatpush.bf16.msra.mxu0 %v651
        %669 = vmatpush.bf16.msra.mxu0 %v650
        %670 = vmatpush.bf16.msra.mxu0 %v649
        %671 = vmatpush.bf16.msra.mxu0 %v648
        %672 = vmatmul.bf16.gmra.mxu0 %v588
        %v673 = vpop.f32.mrf.mxu0
        %v674 = vadd.f32 %v614, %v673
        %v675 = vpop.f32.mrf.mxu0
        %v676 = vadd.f32 %v614, %v675
        %677 = vmatmul.bf16.gmra.mxu0 %v589
        %v678 = vpop.f32.mrf.mxu0
        %v679 = vadd.f32 %v614, %v678
        %v680 = vpop.f32.mrf.mxu0
        %v681 = vadd.f32 %v614, %v680
        %682 = vmatmul.bf16.gmra.mxu0 %v590
        %v683 = vpop.f32.mrf.mxu0
        %v684 = vadd.f32 %v614, %v683
        %v685 = vpop.f32.mrf.mxu0
        %v686 = vadd.f32 %v614, %v685
        %687 = vmatmul.bf16.gmra.mxu0 %v591
        %v688 = vpop.f32.mrf.mxu0
        %v689 = vadd.f32 %v614, %v688
        %v690 = vpop.f32.mrf.mxu0
        %v691 = vadd.f32 %v614, %v690
        %692 = vmatmul.bf16.gmra.mxu0 %v592
        %v693 = vpop.f32.mrf.mxu0
        %v694 = vadd.f32 %v614, %v693
        %v695 = vpop.f32.mrf.mxu0
        %v696 = vadd.f32 %v614, %v695
        %697 = vmatmul.bf16.gmra.mxu0 %v593
        %v698 = vpop.f32.mrf.mxu0
        %v699 = vadd.f32 %v614, %v698
        %v700 = vpop.f32.mrf.mxu0
        %v701 = vadd.f32 %v614, %v700
        %702 = vmatmul.bf16.gmra.mxu0 %v594
        %v703 = vpop.f32.mrf.mxu0
        %v704 = vadd.f32 %v614, %v703
        %v705 = vpop.f32.mrf.mxu0
        %v706 = vadd.f32 %v614, %v705
        %707 = vmatmul.bf16.gmra.mxu0 %v595
        %v708 = vpop.f32.mrf.mxu0
        %v709 = vadd.f32 %v614, %v708
        %v710 = vpop.f32.mrf.mxu0
        %v711 = vadd.f32 %v614, %v710
        %712 = vdwg.mxu0
        %713 = vmax.xlane.f32.xlu0 %v674
        %v714 = vpop.xlane.xlu0 %713
        %715 = vmax.xlane.f32.xlu0 %v676
        %v716 = vpop.xlane.xlu0 %715
        %717 = vmax.xlane.f32.xlu0 %v679
        %v718 = vpop.xlane.xlu0 %717
        %719 = vmax.xlane.f32.xlu0 %v681
        %v720 = vpop.xlane.xlu0 %719
        %721 = vmax.xlane.f32.xlu0 %v684
        %v722 = vpop.xlane.xlu0 %721
        %723 = vmax.xlane.f32.xlu0 %v686
        %v724 = vpop.xlane.xlu0 %723
        %725 = vmax.xlane.f32.xlu0 %v689
        %v726 = vpop.xlane.xlu0 %725
        %727 = vmax.xlane.f32.xlu0 %v691
        %v728 = vpop.xlane.xlu0 %727
        %729 = vmax.xlane.f32.xlu0 %v694
        %v730 = vpop.xlane.xlu0 %729
        %731 = vmax.xlane.f32.xlu0 %v696
        %v732 = vpop.xlane.xlu0 %731
        %733 = vmax.xlane.f32.xlu0 %v699
        %v734 = vpop.xlane.xlu0 %733
        %735 = vmax.xlane.f32.xlu0 %v701
        %v736 = vpop.xlane.xlu0 %735
        %737 = vmax.xlane.f32.xlu0 %v704
        %v738 = vpop.xlane.xlu0 %737
        %739 = vmax.xlane.f32.xlu0 %v706
        %v740 = vpop.xlane.xlu0 %739
        %741 = vmax.xlane.f32.xlu0 %v709
        %v742 = vpop.xlane.xlu0 %741
        %743 = vmax.xlane.f32.xlu0 %v711
        %v744 = vpop.xlane.xlu0 %743
        %v745 = vsub.f32 %v674, %v714
        %v746 = vsub.f32 %v676, %v716
        %v747 = vsub.f32 %v679, %v718
        %v748 = vsub.f32 %v681, %v720
        %v749 = vsub.f32 %v684, %v722
        %v750 = vsub.f32 %v686, %v724
        %v751 = vsub.f32 %v689, %v726
        %v752 = vsub.f32 %v691, %v728
        %v753 = vsub.f32 %v694, %v730
        %v754 = vsub.f32 %v696, %v732
        %v755 = vsub.f32 %v699, %v734
        %v756 = vsub.f32 %v701, %v736
        %v757 = vsub.f32 %v704, %v738
        %v758 = vsub.f32 %v706, %v740
        %v759 = vsub.f32 %v709, %v742
        %v760 = vsub.f32 %v711, %v744
        %v761 = vmul.f32 %v745, 1.442695
        %v762 = vpow.pop %v761
        %v763 = vmul.f32 %v746, 1.442695
        %v764 = vpow.pop %v763
        %v765 = vmul.f32 %v747, 1.442695
        %v766 = vpow.pop %v765
        %v767 = vmul.f32 %v748, 1.442695
        %v768 = vpow.pop %v767
        %v769 = vmul.f32 %v749, 1.442695
        %v770 = vpow.pop %v769
        %v771 = vmul.f32 %v750, 1.442695
        %v772 = vpow.pop %v771
        %v773 = vmul.f32 %v751, 1.442695
        %v774 = vpow.pop %v773
        %v775 = vmul.f32 %v752, 1.442695
        %v776 = vpow.pop %v775
        %v777 = vmul.f32 %v753, 1.442695
        %v778 = vpow.pop %v777
        %v779 = vmul.f32 %v754, 1.442695
        %v780 = vpow.pop %v779
        %v781 = vmul.f32 %v755, 1.442695
        %v782 = vpow.pop %v781
        %v783 = vmul.f32 %v756, 1.442695
        %v784 = vpow.pop %v783
        %v785 = vmul.f32 %v757, 1.442695
        %v786 = vpow.pop %v785
        %v787 = vmul.f32 %v758, 1.442695
        %v788 = vpow.pop %v787
        %v789 = vmul.f32 %v759, 1.442695
        %v790 = vpow.pop %v789
        %v791 = vmul.f32 %v760, 1.442695
        %v792 = vpow.pop %v791
        %793 = vadd.xlane.f32.xlu0 %v762
        %v794 = vpop.xlane.xlu0 %793
        %795 = vadd.xlane.f32.xlu0 %v764
        %v796 = vpop.xlane.xlu0 %795
        %797 = vadd.xlane.f32.xlu0 %v766
        %v798 = vpop.xlane.xlu0 %797
        %799 = vadd.xlane.f32.xlu0 %v768
        %v800 = vpop.xlane.xlu0 %799
        %801 = vadd.xlane.f32.xlu0 %v770
        %v802 = vpop.xlane.xlu0 %801
        %803 = vadd.xlane.f32.xlu0 %v772
        %v804 = vpop.xlane.xlu0 %803
        %805 = vadd.xlane.f32.xlu0 %v774
        %v806 = vpop.xlane.xlu0 %805
        %807 = vadd.xlane.f32.xlu0 %v776
        %v808 = vpop.xlane.xlu0 %807
        %809 = vadd.xlane.f32.xlu0 %v778
        %v810 = vpop.xlane.xlu0 %809
        %811 = vadd.xlane.f32.xlu0 %v780
        %v812 = vpop.xlane.xlu0 %811
        %813 = vadd.xlane.f32.xlu0 %v782
        %v814 = vpop.xlane.xlu0 %813
        %815 = vadd.xlane.f32.xlu0 %v784
        %v816 = vpop.xlane.xlu0 %815
        %817 = vadd.xlane.f32.xlu0 %v786
        %v818 = vpop.xlane.xlu0 %817
        %819 = vadd.xlane.f32.xlu0 %v788
        %v820 = vpop.xlane.xlu0 %819
        %821 = vadd.xlane.f32.xlu0 %v790
        %v822 = vpop.xlane.xlu0 %821
        %823 = vadd.xlane.f32.xlu0 %v792
        %v824 = vpop.xlane.xlu0 %823
        %v825 = vrcp.pop %v794
        %v826 = vmul.f32 %v794, %v825
        %v827 = vsub.f32 1.0, %v826
        %v828 = vmul.f32 %v825, %v827
        %v829 = vadd.f32 %v825, %v828
        %vm830 = vweird.f32 %v794
        %vm831 = vweird.f32 %v825
        %vm832 = vmor %vm830, %vm831
        %v833 = vsel %vm832, %v825, %v829
        %v834 = vand.u32 2147483647, %v794
        %vm835 = vcmp.eq.f32.partialorder %v834, 8.507059e+37
        %v836 = vand.u32 %v794, 2147483648
        %v837 = vor.u32 1.1754944e-38, %v836
        %v838 = vsel %vm835, %v837, %v833
        %v839 = vmul.f32 %v762, %v838
        %v840 = vrcp.pop %v796
        %v841 = vmul.f32 %v796, %v840
        %v842 = vsub.f32 1.0, %v841
        %v843 = vmul.f32 %v840, %v842
        %v844 = vadd.f32 %v840, %v843
        %vm845 = vweird.f32 %v796
        %vm846 = vweird.f32 %v840
        %vm847 = vmor %vm845, %vm846
        %v848 = vsel %vm847, %v840, %v844
        %v849 = vand.u32 2147483647, %v796
        %vm850 = vcmp.eq.f32.partialorder %v849, 8.507059e+37
        %v851 = vand.u32 %v796, 2147483648
        %v852 = vor.u32 1.1754944e-38, %v851
        %v853 = vsel %vm850, %v852, %v848
        %v854 = vmul.f32 %v764, %v853
        %v855 = vrcp.pop %v798
        %v856 = vmul.f32 %v798, %v855
        %v857 = vsub.f32 1.0, %v856
        %v858 = vmul.f32 %v855, %v857
        %v859 = vadd.f32 %v855, %v858
        %vm860 = vweird.f32 %v798
        %vm861 = vweird.f32 %v855
        %vm862 = vmor %vm860, %vm861
        %v863 = vsel %vm862, %v855, %v859
        %v864 = vand.u32 2147483647, %v798
        %vm865 = vcmp.eq.f32.partialorder %v864, 8.507059e+37
        %v866 = vand.u32 %v798, 2147483648
        %v867 = vor.u32 1.1754944e-38, %v866
        %v868 = vsel %vm865, %v867, %v863
        %v869 = vmul.f32 %v766, %v868
        %v870 = vrcp.pop %v800
        %v871 = vmul.f32 %v800, %v870
        %v872 = vsub.f32 1.0, %v871
        %v873 = vmul.f32 %v870, %v872
        %v874 = vadd.f32 %v870, %v873
        %vm875 = vweird.f32 %v800
        %vm876 = vweird.f32 %v870
        %vm877 = vmor %vm875, %vm876
        %v878 = vsel %vm877, %v870, %v874
        %v879 = vand.u32 2147483647, %v800
        %vm880 = vcmp.eq.f32.partialorder %v879, 8.507059e+37
        %v881 = vand.u32 %v800, 2147483648
        %v882 = vor.u32 1.1754944e-38, %v881
        %v883 = vsel %vm880, %v882, %v878
        %v884 = vmul.f32 %v768, %v883
        %v885 = vrcp.pop %v802
        %v886 = vmul.f32 %v802, %v885
        %v887 = vsub.f32 1.0, %v886
        %v888 = vmul.f32 %v885, %v887
        %v889 = vadd.f32 %v885, %v888
        %vm890 = vweird.f32 %v802
        %vm891 = vweird.f32 %v885
        %vm892 = vmor %vm890, %vm891
        %v893 = vsel %vm892, %v885, %v889
        %v894 = vand.u32 2147483647, %v802
        %vm895 = vcmp.eq.f32.partialorder %v894, 8.507059e+37
        %v896 = vand.u32 %v802, 2147483648
        %v897 = vor.u32 1.1754944e-38, %v896
        %v898 = vsel %vm895, %v897, %v893
        %v899 = vmul.f32 %v770, %v898
        %v900 = vrcp.pop %v804
        %v901 = vmul.f32 %v804, %v900
        %v902 = vsub.f32 1.0, %v901
        %v903 = vmul.f32 %v900, %v902
        %v904 = vadd.f32 %v900, %v903
        %vm905 = vweird.f32 %v804
        %vm906 = vweird.f32 %v900
        %vm907 = vmor %vm905, %vm906
        %v908 = vsel %vm907, %v900, %v904
        %v909 = vand.u32 2147483647, %v804
        %vm910 = vcmp.eq.f32.partialorder %v909, 8.507059e+37
        %v911 = vand.u32 %v804, 2147483648
        %v912 = vor.u32 1.1754944e-38, %v911
        %v913 = vsel %vm910, %v912, %v908
        %v914 = vmul.f32 %v772, %v913
        %v915 = vrcp.pop %v806
        %v916 = vmul.f32 %v806, %v915
        %v917 = vsub.f32 1.0, %v916
        %v918 = vmul.f32 %v915, %v917
        %v919 = vadd.f32 %v915, %v918
        %vm920 = vweird.f32 %v806
        %vm921 = vweird.f32 %v915
        %vm922 = vmor %vm920, %vm921
        %v923 = vsel %vm922, %v915, %v919
        %v924 = vand.u32 2147483647, %v806
        %vm925 = vcmp.eq.f32.partialorder %v924, 8.507059e+37
        %v926 = vand.u32 %v806, 2147483648
        %v927 = vor.u32 1.1754944e-38, %v926
        %v928 = vsel %vm925, %v927, %v923
        %v929 = vmul.f32 %v774, %v928
        %v930 = vrcp.pop %v808
        %v931 = vmul.f32 %v808, %v930
        %v932 = vsub.f32 1.0, %v931
        %v933 = vmul.f32 %v930, %v932
        %v934 = vadd.f32 %v930, %v933
        %vm935 = vweird.f32 %v808
        %vm936 = vweird.f32 %v930
        %vm937 = vmor %vm935, %vm936
        %v938 = vsel %vm937, %v930, %v934
        %v939 = vand.u32 2147483647, %v808
        %vm940 = vcmp.eq.f32.partialorder %v939, 8.507059e+37
        %v941 = vand.u32 %v808, 2147483648
        %v942 = vor.u32 1.1754944e-38, %v941
        %v943 = vsel %vm940, %v942, %v938
        %v944 = vmul.f32 %v776, %v943
        %v945 = vrcp.pop %v810
        %v946 = vmul.f32 %v810, %v945
        %v947 = vsub.f32 1.0, %v946
        %v948 = vmul.f32 %v945, %v947
        %v949 = vadd.f32 %v945, %v948
        %vm950 = vweird.f32 %v810
        %vm951 = vweird.f32 %v945
        %vm952 = vmor %vm950, %vm951
        %v953 = vsel %vm952, %v945, %v949
        %v954 = vand.u32 2147483647, %v810
        %vm955 = vcmp.eq.f32.partialorder %v954, 8.507059e+37
        %v956 = vand.u32 %v810, 2147483648
        %v957 = vor.u32 1.1754944e-38, %v956
        %v958 = vsel %vm955, %v957, %v953
        %v959 = vmul.f32 %v778, %v958
        %v960 = vrcp.pop %v812
        %v961 = vmul.f32 %v812, %v960
        %v962 = vsub.f32 1.0, %v961
        %v963 = vmul.f32 %v960, %v962
        %v964 = vadd.f32 %v960, %v963
        %vm965 = vweird.f32 %v812
        %vm966 = vweird.f32 %v960
        %vm967 = vmor %vm965, %vm966
        %v968 = vsel %vm967, %v960, %v964
        %v969 = vand.u32 2147483647, %v812
        %vm970 = vcmp.eq.f32.partialorder %v969, 8.507059e+37
        %v971 = vand.u32 %v812, 2147483648
        %v972 = vor.u32 1.1754944e-38, %v971
        %v973 = vsel %vm970, %v972, %v968
        %v974 = vmul.f32 %v780, %v973
        %v975 = vrcp.pop %v814
        %v976 = vmul.f32 %v814, %v975
        %v977 = vsub.f32 1.0, %v976
        %v978 = vmul.f32 %v975, %v977
        %v979 = vadd.f32 %v975, %v978
        %vm980 = vweird.f32 %v814
        %vm981 = vweird.f32 %v975
        %vm982 = vmor %vm980, %vm981
        %v983 = vsel %vm982, %v975, %v979
        %v984 = vand.u32 2147483647, %v814
        %vm985 = vcmp.eq.f32.partialorder %v984, 8.507059e+37
        %v986 = vand.u32 %v814, 2147483648
        %v987 = vor.u32 1.1754944e-38, %v986
        %v988 = vsel %vm985, %v987, %v983
        %v989 = vmul.f32 %v782, %v988
        %v990 = vrcp.pop %v816
        %v991 = vmul.f32 %v816, %v990
        %v992 = vsub.f32 1.0, %v991
        %v993 = vmul.f32 %v990, %v992
        %v994 = vadd.f32 %v990, %v993
        %vm995 = vweird.f32 %v816
        %vm996 = vweird.f32 %v990
        %vm997 = vmor %vm995, %vm996
        %v998 = vsel %vm997, %v990, %v994
        %v999 = vand.u32 2147483647, %v816
        %vm1000 = vcmp.eq.f32.partialorder %v999, 8.507059e+37
        %v1001 = vand.u32 %v816, 2147483648
        %v1002 = vor.u32 1.1754944e-38, %v1001
        %v1003 = vsel %vm1000, %v1002, %v998
        %v1004 = vmul.f32 %v784, %v1003
        %v1005 = vrcp.pop %v818
        %v1006 = vmul.f32 %v818, %v1005
        %v1007 = vsub.f32 1.0, %v1006
        %v1008 = vmul.f32 %v1005, %v1007
        %v1009 = vadd.f32 %v1005, %v1008
        %vm1010 = vweird.f32 %v818
        %vm1011 = vweird.f32 %v1005
        %vm1012 = vmor %vm1010, %vm1011
        %v1013 = vsel %vm1012, %v1005, %v1009
        %v1014 = vand.u32 2147483647, %v818
        %vm1015 = vcmp.eq.f32.partialorder %v1014, 8.507059e+37
        %v1016 = vand.u32 %v818, 2147483648
        %v1017 = vor.u32 1.1754944e-38, %v1016
        %v1018 = vsel %vm1015, %v1017, %v1013
        %v1019 = vmul.f32 %v786, %v1018
        %v1020 = vrcp.pop %v820
        %v1021 = vmul.f32 %v820, %v1020
        %v1022 = vsub.f32 1.0, %v1021
        %v1023 = vmul.f32 %v1020, %v1022
        %v1024 = vadd.f32 %v1020, %v1023
        %vm1025 = vweird.f32 %v820
        %vm1026 = vweird.f32 %v1020
        %vm1027 = vmor %vm1025, %vm1026
        %v1028 = vsel %vm1027, %v1020, %v1024
        %v1029 = vand.u32 2147483647, %v820
        %vm1030 = vcmp.eq.f32.partialorder %v1029, 8.507059e+37
        %v1031 = vand.u32 %v820, 2147483648
        %v1032 = vor.u32 1.1754944e-38, %v1031
        %v1033 = vsel %vm1030, %v1032, %v1028
        %v1034 = vmul.f32 %v788, %v1033
        %v1035 = vrcp.pop %v822
        %v1036 = vmul.f32 %v822, %v1035
        %v1037 = vsub.f32 1.0, %v1036
        %v1038 = vmul.f32 %v1035, %v1037
        %v1039 = vadd.f32 %v1035, %v1038
        %vm1040 = vweird.f32 %v822
        %vm1041 = vweird.f32 %v1035
        %vm1042 = vmor %vm1040, %vm1041
        %v1043 = vsel %vm1042, %v1035, %v1039
        %v1044 = vand.u32 2147483647, %v822
        %vm1045 = vcmp.eq.f32.partialorder %v1044, 8.507059e+37
        %v1046 = vand.u32 %v822, 2147483648
        %v1047 = vor.u32 1.1754944e-38, %v1046
        %v1048 = vsel %vm1045, %v1047, %v1043
        %v1049 = vmul.f32 %v790, %v1048
        %v1050 = vrcp.pop %v824
        %v1051 = vmul.f32 %v824, %v1050
        %v1052 = vsub.f32 1.0, %v1051
        %v1053 = vmul.f32 %v1050, %v1052
        %v1054 = vadd.f32 %v1050, %v1053
        %vm1055 = vweird.f32 %v824
        %vm1056 = vweird.f32 %v1050
        %vm1057 = vmor %vm1055, %vm1056
        %v1058 = vsel %vm1057, %v1050, %v1054
        %v1059 = vand.u32 2147483647, %v824
        %vm1060 = vcmp.eq.f32.partialorder %v1059, 8.507059e+37
        %v1061 = vand.u32 %v824, 2147483648
        %v1062 = vor.u32 1.1754944e-38, %v1061
        %v1063 = vsel %vm1060, %v1062, %v1058
        %v1064 = vmul.f32 %v792, %v1063
        %v1065 = vpack.c.bf16 %v839, %v839
        %v1066 = vpack.c.bf16 %v854, %v854
        %v1067 = vpack.c.bf16 %v869, %v869
        %v1068 = vpack.c.bf16 %v884, %v884
        %v1069 = vpack.c.bf16 %v899, %v899
        %v1070 = vpack.c.bf16 %v914, %v914
        %v1071 = vpack.c.bf16 %v929, %v929
        %v1072 = vpack.c.bf16 %v944, %v944
        %v1073 = vpack.c.bf16 %v959, %v959
        %v1074 = vpack.c.bf16 %v974, %v974
        %v1075 = vpack.c.bf16 %v989, %v989
        %v1076 = vpack.c.bf16 %v1004, %v1004
        %v1077 = vpack.c.bf16 %v1019, %v1019
        %v1078 = vpack.c.bf16 %v1034, %v1034
        %v1079 = vpack.c.bf16 %v1049, %v1049
        %v1080 = vpack.c.bf16 %v1064, %v1064
        %1081 = vst [vmem:[%s272] sm:$0xf] %v1065
        %1082 = vst [vmem:[%s272 + $0x4] sm:$0xf] %v1066
        %1083 = vst [vmem:[%s272 + $0x8] sm:$0xf] %v1067
        %1084 = vst [vmem:[%s272 + $0xc] sm:$0xf] %v1068
        %1085 = vst [vmem:[%s272 + $0x10] sm:$0xf] %v1069
        %1086 = vst [vmem:[%s272 + $0x14] sm:$0xf] %v1070
        %1087 = vst [vmem:[%s272 + $0x18] sm:$0xf] %v1071
        %1088 = vst [vmem:[%s272 + $0x1c] sm:$0xf] %v1072
        %1089 = vst [vmem:[%s272 + $0x20] sm:$0xf] %v1073
        %1090 = vst [vmem:[%s272 + $0x24] sm:$0xf] %v1074
        %1091 = vst [vmem:[%s272 + $0x28] sm:$0xf] %v1075
        %1092 = vst [vmem:[%s272 + $0x2c] sm:$0xf] %v1076
        %1093 = vst [vmem:[%s272 + $0x30] sm:$0xf] %v1077
        %1094 = vst [vmem:[%s272 + $0x34] sm:$0xf] %v1078
        %1095 = vst [vmem:[%s272 + $0x38] sm:$0xf] %v1079
        %1096 = vst [vmem:[%s272 + $0x3c] sm:$0xf] %v1080
        %s1097 = sand.u32 %s181, 1
        %s1098 = scalar_lea.sflag [#allocation3], %s1097
        %s1099 = sand.u32 %s181, 1
        %s1100 = smul.addr %s1099, 64
        %s1101 = scalar_lea.vmem [#allocation2], %s1100
        // Predicated region
        $region49: #{tpu_custom_call.1} parent=47 // pred_check
          %p1102 = pneg %p191
        $region50: #{tpu_custom_call.1} parent=47 // pred_check_branch
          %1104 = sbr.rel (%p1102) target = $region52
        $region51: #{tpu_custom_call.1} parent=47 // pred_region
          %s1105 = smul.u32 16, %s21
          %1107 = vsyncadd %s1098, 0
          %s1108 = smul.addr %s1105, 4
          %s1109 = scalar_lea.hbm %s7, %s1108
          %s1110 = sshll.u32 %s1101, 4
          %s1111 = int_to_ptr.vmem [resolvable:$true] %s1110
          %s1112 = sshll.u32 %s1109, 4
          %s1113 = int_to_ptr.hbm [resolvable:$true] %s1112
          %1118 = dma.vmem_to_hbm [thread:$0]  %s1111, 1024, %s1113, %s1098, 64, 64, 4
        $region52: #{tpu_custom_call.1} parent=47 // pred_fallthru
          _
      $region48: #{tpu_custom_call.1} parent=5 // pred_fallthru
        _
      %p1119 = scmp.le.s32.totalorder 2, %s16
      // Predicated region
      $region53: #{tpu_custom_call.1} parent=5 // pred_check
        %p1120 = pneg %p1119
      $region54: #{tpu_custom_call.1} parent=5 // pred_check_branch
        %1122 = sbr.rel (%p1120) target = $region56
      $region55: #{tpu_custom_call.1} parent=5 // pred_region
        %s1123 = ssub.s32 %s16, 2
        // Predicated region
        $region57: #{tpu_custom_call.1} parent=55 // pred_check
          %p1124 = pneg %p197
        $region58: #{tpu_custom_call.1} parent=55 // pred_check_branch
          %1126 = sbr.rel (%p1124) target = $region60
        $region59: #{tpu_custom_call.1} parent=55 // pred_region
          %s1127 = sand.u32 %s182, 1
          %s1128 = scalar_lea.sflag [#allocation3], %s1127
          %s1129 = sand.u32 %s182, 1
          %s1130 = smul.addr %s1129, 64
          %s1131 = scalar_lea.vmem [#allocation2], %s1130
          %1133 = dma.done %s1128, 1024
        $region60: #{tpu_custom_call.1} parent=55 // pred_fallthru
          _
      $region56: #{tpu_custom_call.1} parent=5 // pred_fallthru
        _
    $region6: #{tpu_custom_call.1} parent=1 // loop_footer
      %s20 = sadd.s32 1, %s16
    $region7: #{tpu_custom_call.1} parent=1 // loop_footer_branch
      %15 = sbr.rel target = $region3
    $region8: #{tpu_custom_call.1} parent=1 // loop_exit
      _
    %1134 = vsyncpa [#allocation3], 1
    %s1135 = scalar_lea.sflag [#allocation3], 1
    %1136 = vsyncpa %s1135, 1

</llo_original>
